<compile_context>
chip_gen: v7x
topology: tpu7x:2x2x1
jax: 0.10.0
libtpu: 0.0.40
codegen_flags: <defaults>
</compile_context>

<pallas_src>
import jax
import jax.numpy as jnp
from jax.experimental import pallas as pl
from jax.experimental.pallas import tpu as pltpu

ALPHA = 0.8
_LANES = 128


def ema_kernel(params_ref, state_ref, out_ref):
    p = params_ref
    s = state_ref

    # --- static sub-views of the packed parameter slab (8,128) -------------
    w_in    = p[0:8, 0:4]      # (8,4)  linear_in weight, (in,out) layout
    w_out_t = p[0:2, 4:8]      # (2,4)  linear_out weight, (out,in) layout
    w_cmb_t = p[0:2, 8:16]     # (2,8)  (w_in @ w_out)^T
    b_in    = p[0:1, 16:20]    # (1,4)  linear_in bias (row)
    b_cmb   = p[0:2, 20:21]    # (2,1)  (1-alpha)*b_in@w_out + b_out (column)

    # --- static sub-views of the packed state slab (8,128) -----------------
    x_row   = s[0:1, 0:8]      # (1,8)  input x (row form)
    ema_row = s[1:2, 0:4]      # (1,4)  EMA buffer (row form)
    x_col   = s[0:8, 8:9]      # (8,1)  input x (column copy, for sublane reduce)

    # EMA update:  ema_new = alpha*ema + (1-alpha)*(x @ w_in + b_in)
    # VPU broadcast-multiply + sublane reduction (no MXU).
    h = jnp.sum(x_col * w_in, axis=0, keepdims=True)              # (1,4)
    ema_new = ALPHA * ema_row + (1.0 - ALPHA) * (h + b_in)        # (1,4)

    # Output head, folded so it does not wait on ema_new:
    #   y = alpha*(ema @ w_out) + (1-alpha)*(x @ W_comb) + b_comb
    # VPU broadcast-multiply + lane reductions -> (2,1) columns.
    t_ema = jnp.sum(ema_row * w_out_t, axis=1, keepdims=True)     # (2,1)
    t_x   = jnp.sum(x_row * w_cmb_t, axis=1, keepdims=True)       # (2,1)
    y_col = ALPHA * t_ema + (1.0 - ALPHA) * t_x + b_cmb           # (2,1)

    # Lane-dense (8,128) output store; tiny in-VMEM sub-stores place results.
    out_ref[...] = jnp.zeros_like(out_ref)
    out_ref[0:2, 0:1] = y_col          # y      at rows 0:2, col 0
    out_ref[2:3, 0:4] = ema_new        # ema_new at row 2, cols 0:4


def pack_params(w_in, b_in, w_out, b_out):
    """Host-side, done once: fold weights and pack into one lane-dense slab."""
    w_in = jnp.asarray(w_in, jnp.float32)                    # (8,4) = torch W_in.T
    b_in = jnp.asarray(b_in, jnp.float32).reshape(1, 4)
    w_out = jnp.asarray(w_out, jnp.float32)                  # (4,2) = torch W_out.T
    b_out = jnp.asarray(b_out, jnp.float32).reshape(1, 2)
    w_comb = w_in @ w_out                                    # (8,2)
    b_comb = (1.0 - ALPHA) * (b_in @ w_out) + b_out          # (1,2)
    slab = jnp.zeros((8, _LANES), jnp.float32)
    slab = slab.at[0:8, 0:4].set(w_in)
    slab = slab.at[0:2, 4:8].set(w_out.T)
    slab = slab.at[0:2, 8:16].set(w_comb.T)
    slab = slab.at[0:1, 16:20].set(b_in)
    slab = slab.at[0:2, 20:21].set(b_comb.reshape(2, 1))
    return slab


def _pack_state(x, x_ema):
    s = jnp.zeros((8, _LANES), jnp.float32)
    s = s.at[0:1, 0:8].set(x)                  # x as a row
    s = s.at[1:2, 0:4].set(x_ema)              # ema as a row
    s = s.at[0:8, 8:9].set(x.reshape(8, 1))    # x as a column
    return s


@jax.jit
def ema_forward(x, x_ema, param_slab):
    """Pallas equivalent of EMAModel.forward_stateless (batch must be 1).

    Returns (y, x_ema_new) with shapes ((1,2), (1,4)).  The caller must thread
    x_ema_new back in to mimic the PyTorch in-place buffer update.
    """
    assert x.shape == (1, 8) and x_ema.shape == (1, 4), "EMA buffer fixes batch=1"
    state = _pack_state(x.astype(jnp.float32), x_ema.astype(jnp.float32))
    vmem = pl.BlockSpec(memory_space=pltpu.VMEM)
    out = pl.pallas_call(
        ema_kernel,
        out_shape=jax.ShapeDtypeStruct((8, _LANES), jnp.float32),
        in_specs=[vmem, vmem],          # one param slab + one state slab
        out_specs=vmem,
        input_output_aliases={1: 0},    # state slab updated in place (buffer)
    )(param_slab, state)
    y = out[0:2, 0].reshape(1, 2)
    x_ema_new = out[2:3, 0:4]
    return y, x_ema_new


if __name__ == "__main__":
    key = jax.random.PRNGKey(0)
    k1, k2, k3, k4 = jax.random.split(key, 4)

    # Parameters (shapes from EMAModel.__init__); stored as (in,out) = torch W.T.
    w_in = jax.random.normal(k1, (8, 4), dtype=jnp.float32) * 0.1
    b_in = jax.random.normal(k2, (1, 4), dtype=jnp.float32) * 0.1
    w_out = jax.random.normal(k3, (4, 2), dtype=jnp.float32) * 0.1
    b_out = jax.random.normal(k4, (1, 2), dtype=jnp.float32) * 0.1

    # Buffer and input exactly as in the PyTorch spec.
    x_ema = jnp.ones((1, 4), dtype=jnp.float32)
    x = jnp.full((1, 8), 3.0, dtype=jnp.float32)

    param_slab = pack_params(w_in, b_in, w_out, b_out)   # once, host-side

    y, x_ema_new = ema_forward(x, x_ema, param_slab)
    jax.block_until_ready((y, x_ema_new))

    # Plain-JAX reference (forward_stateless semantics).
    h_ref = x @ w_in + b_in
    ema_ref = ALPHA * x_ema + (1.0 - ALPHA) * h_ref
    y_ref = ema_ref @ w_out + b_out
    assert y.shape == (1, 2) and x_ema_new.shape == (1, 4)
    assert jnp.allclose(x_ema_new, ema_ref, atol=1e-5), "ema mismatch"
    assert jnp.allclose(y, y_ref, atol=1e-5), "output mismatch"

    # Second step to exercise the stateful threading of the buffer.
    y2, x_ema_2 = ema_forward(x, x_ema_new, param_slab)
    jax.block_until_ready((y2, x_ema_2))
    ema_ref2 = ALPHA * ema_ref + (1.0 - ALPHA) * h_ref
    y_ref2 = ema_ref2 @ w_out + b_out
    assert jnp.allclose(x_ema_2, ema_ref2, atol=1e-5), "ema step-2 mismatch"
    assert jnp.allclose(y2, y_ref2, atol=1e-5), "output step-2 mismatch"

    print("KERNEL_OK")
</pallas_src>

<mosaic_0001>
module attributes {stable_mosaic.version = 11 : i64} {
  func.func @ema_kernel(%arg0: memref<8x128xf32, #tpu.memory_space<vmem>>, %arg1: memref<8x128xf32, #tpu.memory_space<vmem>>, %arg2: memref<8x128xf32, #tpu.memory_space<vmem>>) attributes {dimension_semantics = [], scalar_prefetch = 0 : i64, scratch_operands = 0 : i64, tpu.core_type = #tpu.core_type<tc>} {
    %c0 = arith.constant 0 : index
    %c0_0 = arith.constant 0 : index
    %0 = vector.load %arg0[%c0, %c0_0] : memref<8x128xf32, #tpu.memory_space<vmem>>, vector<8x4xf32>
    %c0_1 = arith.constant 0 : index
    %c4 = arith.constant 4 : index
    %1 = vector.load %arg0[%c0_1, %c4] : memref<8x128xf32, #tpu.memory_space<vmem>>, vector<2x4xf32>
    %c0_2 = arith.constant 0 : index
    %c8 = arith.constant 8 : index
    %2 = vector.load %arg0[%c0_2, %c8] : memref<8x128xf32, #tpu.memory_space<vmem>>, vector<2x8xf32>
    %c0_3 = arith.constant 0 : index
    %c16 = arith.constant 16 : index
    %3 = vector.load %arg0[%c0_3, %c16] : memref<8x128xf32, #tpu.memory_space<vmem>>, vector<1x4xf32>
    %c0_4 = arith.constant 0 : index
    %c20 = arith.constant 20 : index
    %4 = vector.load %arg0[%c0_4, %c20] : memref<8x128xf32, #tpu.memory_space<vmem>>, vector<2x1xf32>
    %c0_5 = arith.constant 0 : index
    %c0_6 = arith.constant 0 : index
    %5 = vector.load %arg1[%c0_5, %c0_6] : memref<8x128xf32, #tpu.memory_space<vmem>>, vector<1x8xf32>
    %c1 = arith.constant 1 : index
    %c0_7 = arith.constant 0 : index
    %6 = vector.load %arg1[%c1, %c0_7] : memref<8x128xf32, #tpu.memory_space<vmem>>, vector<1x4xf32>
    %c0_8 = arith.constant 0 : index
    %c8_9 = arith.constant 8 : index
    %7 = vector.load %arg1[%c0_8, %c8_9] : memref<8x128xf32, #tpu.memory_space<vmem>>, vector<8x1xf32>
    %8 = vector.broadcast %7 : vector<8x1xf32> to vector<8x4xf32>
    %9 = arith.mulf %8, %0 : vector<8x4xf32>
    %cst = arith.constant dense<0.000000e+00> : vector<4xf32>
    %10 = vector.multi_reduction <add>, %9, %cst [0] : vector<8x4xf32> to vector<4xf32>
    %11 = vector.shape_cast %10 : vector<4xf32> to vector<1x4xf32>
    %cst_10 = arith.constant 8.000000e-01 : f32
    %12 = vector.broadcast %cst_10 : f32 to vector<1x4xf32>
    %13 = arith.mulf %12, %6 : vector<1x4xf32>
    %14 = arith.addf %11, %3 : vector<1x4xf32>
    %cst_11 = arith.constant 2.000000e-01 : f32
    %15 = vector.broadcast %cst_11 : f32 to vector<1x4xf32>
    %16 = arith.mulf %15, %14 : vector<1x4xf32>
    %17 = arith.addf %13, %16 : vector<1x4xf32>
    %18 = vector.broadcast %6 : vector<1x4xf32> to vector<2x4xf32>
    %19 = arith.mulf %18, %1 : vector<2x4xf32>
    %cst_12 = arith.constant dense<0.000000e+00> : vector<2xf32>
    %20 = vector.multi_reduction <add>, %19, %cst_12 [1] : vector<2x4xf32> to vector<2xf32>
    %21 = vector.shape_cast %20 : vector<2xf32> to vector<2x1xf32>
    %22 = vector.broadcast %5 : vector<1x8xf32> to vector<2x8xf32>
    %23 = arith.mulf %22, %2 : vector<2x8xf32>
    %cst_13 = arith.constant dense<0.000000e+00> : vector<2xf32>
    %24 = vector.multi_reduction <add>, %23, %cst_13 [1] : vector<2x8xf32> to vector<2xf32>
    %25 = vector.shape_cast %24 : vector<2xf32> to vector<2x1xf32>
    %cst_14 = arith.constant 8.000000e-01 : f32
    %26 = vector.broadcast %cst_14 : f32 to vector<2x1xf32>
    %27 = arith.mulf %26, %21 : vector<2x1xf32>
    %cst_15 = arith.constant 2.000000e-01 : f32
    %28 = vector.broadcast %cst_15 : f32 to vector<2x1xf32>
    %29 = arith.mulf %28, %25 : vector<2x1xf32>
    %30 = arith.addf %27, %29 : vector<2x1xf32>
    %31 = arith.addf %30, %4 : vector<2x1xf32>
    %cst_16 = arith.constant 0.000000e+00 : f32
    %32 = vector.broadcast %cst_16 : f32 to vector<8x128xf32>
    %c0_17 = arith.constant 0 : index
    %c0_18 = arith.constant 0 : index
    %33 = vector.load %arg2[%c0_17, %c0_18] : memref<8x128xf32, #tpu.memory_space<vmem>>, vector<8x128xf32>
    tpu.vector_store %arg2[%c0_17, %c0_18], %32 {strides = array<i32>} : memref<8x128xf32, #tpu.memory_space<vmem>>, vector<8x128xf32>,
    %c0_19 = arith.constant 0 : index
    %c0_20 = arith.constant 0 : index
    %34 = vector.load %arg2[%c0_19, %c0_20] : memref<8x128xf32, #tpu.memory_space<vmem>>, vector<2x1xf32>
    tpu.vector_store %arg2[%c0_19, %c0_20], %31 {strides = array<i32>} : memref<8x128xf32, #tpu.memory_space<vmem>>, vector<2x1xf32>,
    %c2 = arith.constant 2 : index
    %c0_21 = arith.constant 0 : index
    %35 = vector.load %arg2[%c2, %c0_21] : memref<8x128xf32, #tpu.memory_space<vmem>>, vector<1x4xf32>
    tpu.vector_store %arg2[%c2, %c0_21], %17 {strides = array<i32>} : memref<8x128xf32, #tpu.memory_space<vmem>>, vector<1x4xf32>,
    return
  }
}

</mosaic_0001>

<llo_original>
// kernel: ema_forward.1
$region0: #{ema_forward.1}
  #allocation0 [shape = 'u32[]', space=smem, size = 0x4, offset = 0x4, fixed_abs, tag = 'smem constant byte address 0x4 - core index']
  #allocation1 [shape = 'u32[144,128]{1,0:T(1,128)}', space=vmem, size = 0x12000, scoped, tag = 'internal scratch']
  %s0 = inlined_call_operand.vmem [shape: f32[8,128], index: 0, kind: input, shape index: {}]
  %s1 = inlined_call_operand.vmem [shape: f32[8,128], index: 1, kind: input, shape index: {}, may-alias: {1,2}]
  %s2 = inlined_call_operand.vmem [shape: f32[8,128], index: 2, kind: output, shape index: {}, may-alias: {1,2}]
  %s3 = sld [smem:[#allocation0]]
  $region18: #{ema_forward.1} parent=0
    _
  %s5 = ssub.s32 1, %s3
  %s6 = scalar_select 0, %s5, %s3
  // Predicated region
  $region2: #{ema_forward.1} parent=0 // pred_check
    _
  $region3: #{ema_forward.1} parent=0 // pred_check_branch
    %8 = sbr.rel (0) target = $region5
  $region4: #{ema_forward.1} parent=0 // pred_region
    _
  $region5: #{ema_forward.1} parent=0 // pred_fallthru
    _
  // Predicated region
  $region6: #{ema_forward.1} parent=0 // pred_check
    _
  $region7: #{ema_forward.1} parent=0 // pred_check_branch
    %10 = sbr.rel (0) target = $region9
  $region8: #{ema_forward.1} parent=0 // pred_region
    _
  $region9: #{ema_forward.1} parent=0 // pred_fallthru
    _
  %v11 = vld [vmem:[%s0] sm:$0xff]
  %v12 = vld [vmem:[%s0] sm:$0x3]
  %v13 = vld [vmem:[%s0] sm:$0x1]
  %v14 = vld [vmem:[%s1] sm:$0x1]
  %v15 = vld [vmem:[%s1 + $0x1] sm:$0x1]
  %v16 = vld [vmem:[%s1] sm:$0xff]
  %18 = vset.pattern.permute.xlu0 8
  %19 = vperm.xlu0 %18, %v16
  %v20 = vpop.permute.xlu0 %19
  %v22 = vmul.f32 %v20, %v11
  %vm23 = vcmask 31744
  %v24 = vsel %vm23, %v22, 0.0
  %v25 = vrot.slane %v24, 4
  %v26 = vadd.f32 %v24, %v25
  %v27 = vrot.slane %v26, 2
  %v28 = vadd.f32 %v26, %v27
  %v29 = vrot.slane %v28, 1
  %v30 = vadd.f32 %v28, %v29
  %v31 = vmul.f32 %v15, 0.8
  %33 = vrot.lane.b32.xlu0 %v13, 112
  %v34 = vpop.permute.xlu0 %33
  %v36 = vadd.f32 %v30, %v34
  %v37 = vmul.f32 %v36, 0.2
  %v38 = vadd.f32 %v31, %v37
  %v39 = vlaneseq
  %v40 = vshrl.u32 %v39, 7
  %v41 = vsub.s32 0, %v40
  %v42 = vrot.slane %v15, %v41
  %44 = vrot.lane.b32.xlu0 %v12, 124
  %v45 = vpop.permute.xlu0 %44
  %v47 = vmul.f32 %v42, %v45
  %vm48 = vcmask 25600
  %v49 = vsel %vm48, %v47, 0.0
  %50 = vadd.xlane.f32.xlu0 %v49
  %v51 = vpop.xlane.xlu0 %50
  %v52 = vlaneseq
  %v53 = vshrl.u32 %v52, 7
  %v54 = vsub.s32 0, %v53
  %v55 = vrot.slane %v14, %v54
  %56 = vrot.lane.b32.xlu0 %v12, 120
  %v57 = vpop.permute.xlu0 %56
  %v59 = vmul.f32 %v55, %v57
  %vm60 = vcmask 58368
  %v61 = vsel %vm60, %v59, 0.0
  %62 = vadd.xlane.f32.xlu0 %v61
  %v63 = vpop.xlane.xlu0 %62
  %v64 = vmul.f32 %v51, 0.8
  %v65 = vmul.f32 %v63, 0.2
  %v66 = vadd.f32 %v64, %v65
  %v67 = vadd.f32 %v66, %v12
  %68 = vst [vmem:[%s2] sm:$0xff] 0.0
  %70 = vrot.lane.b32.xlu0 %v67, 108
  %v71 = vpop.permute.xlu0 %70
  %vm73 = vcmask 1024
  %74 = vst.msk [vmem:[%s2] sm:$0x3] %vm73, %v71
  %vm75 = vcmask 24576
  %76 = vst.msk [vmem:[%s2 + $0x2] sm:$0x1] %vm75, %v38
  // Predicated region
  $region10: #{ema_forward.1} parent=0 // pred_check
    _
  $region11: #{ema_forward.1} parent=0 // pred_check_branch
    %78 = sbr.rel (0) target = $region13
  $region12: #{ema_forward.1} parent=0 // pred_region
    _
  $region13: #{ema_forward.1} parent=0 // pred_fallthru
    _
  // Predicated region
  $region14: #{ema_forward.1} parent=0 // pred_check
    _
  $region15: #{ema_forward.1} parent=0 // pred_check_branch
    %80 = sbr.rel (0) target = $region17
  $region16: #{ema_forward.1} parent=0 // pred_region
    _
  $region17: #{ema_forward.1} parent=0 // pred_fallthru
    _

</llo_original>
